<compile_context>
chip_gen: v7x
topology: tpu7x:2x2x1
jax: 0.10.0
libtpu: 0.0.40
codegen_flags: <defaults>
</compile_context>

<pallas_src>
import functools

import jax
import jax.numpy as jnp
from jax.experimental import pallas as pl
from jax.experimental.pallas import tpu as pltpu


FP = 128  # padded lane / feature width (multiple of 128 -> lane-dense vregs)


def _round_up(n, m):
    return ((n + m - 1) // m) * m


# ----------------------------------------------------------------------------
# Fused kernel: prelude + all SAGEConv('mean') layers in one invocation.
#   refs = (x_ref, a_refs[0..L-1], d_refs[0..L-1], w_refs[0..L-1], b_ref, o_ref)
#   x_ref : (ns_pad0, FP)          bf16  padded input features
#   a_l   : (nd_pad_l, ns_pad_l)   bf16  neighbor COUNT matrix of block l (exact ints)
#   d_l   : (nd_pad_l, 1)          f32   per-dst reciprocal degree (0 for padded rows)
#   w_l   : (2*FP, FP)             bf16  [W_self ; W_neigh] stacked along K, zero-padded
#   b_ref : (L+1, FP)              f32   row 0 = model bias, row l+1 = layer-l bias
#   o_ref : (nd_pad_last, FP)      f32
# ----------------------------------------------------------------------------
def _fused_mpddp_kernel(x_ref, *refs, n_dst_pad, n_layers, split_k):
    a_refs = refs[:n_layers]
    d_refs = refs[n_layers:2 * n_layers]
    w_refs = refs[2 * n_layers:3 * n_layers]
    b_ref = refs[3 * n_layers]
    o_ref = refs[3 * n_layers + 1]

    biases = b_ref[...]                                      # (L+1, FP) f32

    # prelude: h = relu(x + model_bias); dropout = identity (eval mode)
    h = jnp.maximum(x_ref[...].astype(jnp.float32) + biases[0:1, :], 0.0)

    for l in range(n_layers):
        nd = n_dst_pad[l]
        hb = h.astype(jnp.bfloat16)                          # single bf16 cast of h
        # mean aggregation: exact-int count matmul, then f32 reciprocal-degree scale
        h_neigh = jnp.dot(a_refs[l][...], hb,
                          preferred_element_type=jnp.float32)        # (nd, FP) f32
        h_neigh = h_neigh * d_refs[l][...]                            # * 1/deg (f32)

        h_dst_bf = hb[:nd]                                   # reuse existing bf16 cast
        h_neigh_bf = h_neigh.astype(jnp.bfloat16)
        w = w_refs[l][...]                                   # (2*FP, FP) bf16

        if split_k:
            # v5e: MXU is 4x128^2 -> two K=128 dots accumulated in f32, no concat.
            h = (jnp.dot(h_dst_bf, w[:FP, :], preferred_element_type=jnp.float32)
                 + jnp.dot(h_neigh_bf, w[FP:, :], preferred_element_type=jnp.float32))
        else:
            # v6e/v7x: 256-wide MXU -> one stacked K=256 dot.
            feat = jnp.concatenate([h_dst_bf, h_neigh_bf], axis=-1)   # (nd, 2*FP) bf16
            h = jnp.dot(feat, w, preferred_element_type=jnp.float32)  # (nd, FP) f32

        h = h + biases[l + 1:l + 2, :]
        if l != n_layers - 1:
            h = jnp.maximum(h, 0.0)   # activation; dropout = identity

    o_ref[...] = h


# ----------------------------------------------------------------------------
# Model wrapper (forward pass of MPDDP).  `blocks` are dense neighbor-count
# matrices C_l of shape (n_dst_l, n_src_l) with integer entries.
# ----------------------------------------------------------------------------
def mpddp_forward(params, blocks, x):
    n_layers = len(params["layers"])
    assert len(blocks) == n_layers
    n_src0, in_feats = x.shape
    n_classes = params["layers"][-1]["b"].shape[0]
    n_dst = [int(c.shape[0]) for c in blocks]
    n_src = [int(c.shape[1]) for c in blocks]
    assert n_src[0] == n_src0
    for l in range(1, n_layers):
        assert n_src[l] == n_dst[l - 1], (l, n_src[l], n_dst[l - 1])

    # padded sizes: contraction (src) dims to multiples of 128; intermediate dst
    # counts must equal the NEXT layer's padded src count; final dst rounded to 8.
    n_src_pad = [_round_up(s, FP) for s in n_src]
    n_dst_pad = []
    for l in range(n_layers):
        if l < n_layers - 1:
            n_dst_pad.append(n_src_pad[l + 1])
        else:
            n_dst_pad.append(_round_up(n_dst[l], 8))
    n_dst_pad = tuple(n_dst_pad)

    # --- host-side prep: lane/row-dense padding + bf16 cast of MXU operands -----
    x_bf = jnp.pad(x, ((0, n_src_pad[0] - n_src0),
                       (0, FP - in_feats))).astype(jnp.bfloat16)

    a_pad, invdeg = [], []
    for l, c in enumerate(blocks):
        cp = jnp.pad(c.astype(jnp.float32),
                     ((0, n_dst_pad[l] - n_dst[l]), (0, n_src_pad[l] - n_src[l])))
        a_pad.append(cp.astype(jnp.bfloat16))                 # exact small integers
        deg = cp.sum(axis=-1, keepdims=True)
        invdeg.append(jnp.where(deg > 0, 1.0 / jnp.maximum(deg, 1.0), 0.0)
                      .astype(jnp.float32))                   # (nd_pad, 1) f32

    w_stacked = []
    b_rows = [jnp.pad(params["bias"].astype(jnp.float32), (0, FP - in_feats))]
    for lp in params["layers"]:
        di, do = lp["w_self"].shape
        w = jnp.zeros((2 * FP, FP), jnp.float32)
        w = w.at[:di, :do].set(lp["w_self"])
        w = w.at[FP:FP + di, :do].set(lp["w_neigh"])
        w_stacked.append(w.astype(jnp.bfloat16))
        b_rows.append(jnp.pad(lp["b"].astype(jnp.float32), (0, FP - do)))
    b_pack = jnp.stack(b_rows, axis=0)                        # (L+1, FP) f32

    # chip-generation gate: split the K=256 combine dot on v5e only
    try:
        kind = jax.devices()[0].device_kind.lower()
    except Exception:  # pragma: no cover
        kind = ""
    split_k = "v5" in kind

    # advisory cost / explicit VMEM budget
    flops = 0
    for l in range(n_layers):
        flops += 2 * n_dst_pad[l] * n_src_pad[l] * FP          # aggregation C @ h
        flops += 2 * n_dst_pad[l] * (2 * FP) * FP              # combine matmul
    bytes_accessed = (n_src_pad[0] * FP * 2
                      + sum(n_dst_pad[l] * n_src_pad[l] * 2 for l in range(n_layers))
                      + sum(n_dst_pad[l] * 4 for l in range(n_layers))
                      + n_layers * 2 * FP * FP * 2
                      + (n_layers + 1) * FP * 4
                      + n_dst_pad[-1] * FP * 4)
    vmem_limit = int(min(max(4 * bytes_accessed, 8 << 20), 32 << 20))

    kernel = functools.partial(_fused_mpddp_kernel, n_dst_pad=n_dst_pad,
                               n_layers=n_layers, split_k=split_k)
    vmem = pl.BlockSpec(memory_space=pltpu.MemorySpace.VMEM)
    out_pad = pl.pallas_call(
        kernel,
        out_shape=jax.ShapeDtypeStruct((n_dst_pad[-1], FP), jnp.float32),
        in_specs=[vmem] * (2 + 3 * n_layers),
        out_specs=vmem,
        compiler_params=pltpu.CompilerParams(vmem_limit_bytes=vmem_limit),
        cost_estimate=pl.CostEstimate(flops=flops, transcendentals=0,
                                      bytes_accessed=bytes_accessed),
    )(x_bf, *a_pad, *invdeg, *w_stacked, b_pack)

    return out_pad[:n_dst[-1], :n_classes]


# ----------------------------------------------------------------------------
# Pure-JAX references for verification (blocks = neighbor-count matrices)
# ----------------------------------------------------------------------------
def mpddp_reference_f32(params, blocks, x):
    h = jnp.maximum(x + params["bias"][None, :], 0.0)
    nl = len(params["layers"])
    for l, (lp, c) in enumerate(zip(params["layers"], blocks)):
        nd = c.shape[0]
        deg = c.sum(axis=-1, keepdims=True)
        a = c / jnp.maximum(deg, 1.0)                         # row-normalized mean
        h_neigh = a @ h
        h = h[:nd] @ lp["w_self"] + h_neigh @ lp["w_neigh"] + lp["b"][None, :]
        if l != nl - 1:
            h = jnp.maximum(h, 0.0)
    return h


def mpddp_reference_bf16(params, blocks, x):
    # mirrors the kernel's bf16-input / f32-accumulate quantization exactly
    bf = jnp.bfloat16
    h = jnp.maximum(x.astype(bf).astype(jnp.float32) + params["bias"][None, :], 0.0)
    nl = len(params["layers"])
    for l, (lp, c) in enumerate(zip(params["layers"], blocks)):
        nd = c.shape[0]
        deg = c.sum(axis=-1, keepdims=True)
        inv = jnp.where(deg > 0, 1.0 / jnp.maximum(deg, 1.0), 0.0)
        hb = h.astype(bf)
        h_neigh = jnp.dot(c.astype(bf), hb, preferred_element_type=jnp.float32) * inv
        h = (jnp.dot(hb[:nd], lp["w_self"].astype(bf),
                     preferred_element_type=jnp.float32)
             + jnp.dot(h_neigh.astype(bf), lp["w_neigh"].astype(bf),
                       preferred_element_type=jnp.float32)
             + lp["b"][None, :])
        if l != nl - 1:
            h = jnp.maximum(h, 0.0)
    return h


# ----------------------------------------------------------------------------
# Deterministic parameter / input construction
# ----------------------------------------------------------------------------
def glorot(key, shape):
    fi, fo = shape
    limit = (6.0 / (fi + fo)) ** 0.5
    return jax.random.uniform(key, shape, jnp.float32, -limit, limit)


def make_block(key, n_dst, n_src, fan):
    # each dst node samples `fan` neighbors among the src nodes; return COUNT matrix
    idx = jax.random.randint(key, (n_dst, fan), 0, n_src)
    return jax.nn.one_hot(idx, n_src, dtype=jnp.float32).sum(axis=1)


if __name__ == "__main__":
    key = jax.random.PRNGKey(0)

    # args: fan_out=[4,4], input_dim=32, num_hidden=32, num_classes=8, dropout=0
    fan_out = [4, 4]
    in_feats, n_hidden, n_classes = 32, 32, 8
    # sampled-block sizes: block0: 64 src -> 16 dst ; block1: 16 src -> 8 dst
    n_src = [64, 16]
    n_dst = [16, 8]

    keys = jax.random.split(key, 10)

    params = {
        "bias": jnp.zeros((in_feats,), jnp.float32),
        "layers": [
            {
                "w_self": glorot(keys[0], (in_feats, n_hidden)),
                "w_neigh": glorot(keys[1], (in_feats, n_hidden)),
                "b": jnp.zeros((n_hidden,), jnp.float32),
            },
            {
                "w_self": glorot(keys[2], (n_hidden, n_classes)),
                "w_neigh": glorot(keys[3], (n_hidden, n_classes)),
                "b": jnp.zeros((n_classes,), jnp.float32),
            },
        ],
    }

    x = jax.random.normal(keys[4], (n_src[0], in_feats), jnp.float32)
    blocks = [
        make_block(keys[5], n_dst[0], n_src[0], fan_out[0]),
        make_block(keys[6], n_dst[1], n_src[1], fan_out[1]),
    ]

    fwd = jax.jit(mpddp_forward)
    out = jax.block_until_ready(fwd(params, blocks, x))

    assert out.shape == (n_dst[-1], n_classes), out.shape

    ref_q = mpddp_reference_bf16(params, blocks, x)   # same quantization as kernel
    ref_f = mpddp_reference_f32(params, blocks, x)    # full-precision model semantics
    assert jnp.allclose(out, ref_q, atol=1e-3, rtol=1e-3), "mismatch vs bf16-matched reference"
    assert jnp.allclose(out, ref_f, atol=5e-2, rtol=5e-2), "mismatch vs f32 reference"

    print("KERNEL_OK")
</pallas_src>

<mosaic_0001>
module attributes {stable_mosaic.version = 11 : i64} {
  func.func @_fused_mpddp_kernel(%arg0: memref<128x128xbf16, #tpu.memory_space<vmem>>, %arg1: memref<128x128xbf16, #tpu.memory_space<vmem>>, %arg2: memref<8x128xbf16, #tpu.memory_space<vmem>>, %arg3: memref<128x1xf32, #tpu.memory_space<vmem>>, %arg4: memref<8x1xf32, #tpu.memory_space<vmem>>, %arg5: memref<256x128xbf16, #tpu.memory_space<vmem>>, %arg6: memref<256x128xbf16, #tpu.memory_space<vmem>>, %arg7: memref<3x128xf32, #tpu.memory_space<vmem>>, %arg8: memref<8x128xf32, #tpu.memory_space<vmem>>) attributes {dimension_semantics = [], scalar_prefetch = 0 : i64, scratch_operands = 0 : i64, tpu.core_type = #tpu.core_type<tc>} {
    %c0 = arith.constant 0 : index
    %c0_0 = arith.constant 0 : index
    %0 = vector.load %arg7[%c0, %c0_0] : memref<3x128xf32, #tpu.memory_space<vmem>>, vector<3x128xf32>
    %c0_1 = arith.constant 0 : index
    %c0_2 = arith.constant 0 : index
    %1 = vector.load %arg0[%c0_1, %c0_2] : memref<128x128xbf16, #tpu.memory_space<vmem>>, vector<128x128xbf16>
    %2 = arith.extf %1 : vector<128x128xbf16> to vector<128x128xf32>
    %3 = vector.extract_strided_slice %0 {offsets = [0, 0], sizes = [1, 128], strides = [1, 1]} : vector<3x128xf32> to vector<1x128xf32>
    %4 = vector.broadcast %3 : vector<1x128xf32> to vector<128x128xf32>
    %5 = arith.addf %2, %4 : vector<128x128xf32>
    %cst = arith.constant 0.000000e+00 : f32
    %6 = vector.broadcast %cst : f32 to vector<128x128xf32>
    %7 = arith.maximumf %5, %6 : vector<128x128xf32>
    %8 = arith.truncf %7 : vector<128x128xf32> to vector<128x128xbf16>
    %c0_3 = arith.constant 0 : index
    %c0_4 = arith.constant 0 : index
    %9 = vector.load %arg1[%c0_3, %c0_4] : memref<128x128xbf16, #tpu.memory_space<vmem>>, vector<128x128xbf16>
    %cst_5 = arith.constant dense<0.000000e+00> : vector<128x128xf32>
    %10 = tpu.matmul %9, %8, %cst_5 {dimension_numbers = #tpu.dot_dimension_numbers<[1], [0], [0], [1], [0, 0, 1, 1], [], []>} : vector<128x128xbf16>, vector<128x128xbf16>, vector<128x128xf32> -> vector<128x128xf32>
    %c0_6 = arith.constant 0 : index
    %c0_7 = arith.constant 0 : index
    %11 = vector.load %arg3[%c0_6, %c0_7] : memref<128x1xf32, #tpu.memory_space<vmem>>, vector<128x1xf32>
    %12 = vector.broadcast %11 : vector<128x1xf32> to vector<128x128xf32>
    %13 = arith.mulf %10, %12 : vector<128x128xf32>
    %14 = arith.truncf %13 : vector<128x128xf32> to vector<128x128xbf16>
    %c0_8 = arith.constant 0 : index
    %c0_9 = arith.constant 0 : index
    %15 = vector.load %arg5[%c0_8, %c0_9] : memref<256x128xbf16, #tpu.memory_space<vmem>>, vector<256x128xbf16>
    %16 = tpu.concatenate %8, %14 in 1 : vector<128x128xbf16>, vector<128x128xbf16> -> vector<128x256xbf16>
    %cst_10 = arith.constant dense<0.000000e+00> : vector<128x128xf32>
    %17 = tpu.matmul %16, %15, %cst_10 {dimension_numbers = #tpu.dot_dimension_numbers<[1], [0], [0], [1], [0, 0, 1, 1], [], []>} : vector<128x256xbf16>, vector<256x128xbf16>, vector<128x128xf32> -> vector<128x128xf32>
    %18 = vector.extract_strided_slice %0 {offsets = [1, 0], sizes = [1, 128], strides = [1, 1]} : vector<3x128xf32> to vector<1x128xf32>
    %19 = vector.broadcast %18 : vector<1x128xf32> to vector<128x128xf32>
    %20 = arith.addf %17, %19 : vector<128x128xf32>
    %cst_11 = arith.constant 0.000000e+00 : f32
    %21 = vector.broadcast %cst_11 : f32 to vector<128x128xf32>
    %22 = arith.maximumf %20, %21 : vector<128x128xf32>
    %23 = arith.truncf %22 : vector<128x128xf32> to vector<128x128xbf16>
    %c0_12 = arith.constant 0 : index
    %c0_13 = arith.constant 0 : index
    %24 = vector.load %arg2[%c0_12, %c0_13] : memref<8x128xbf16, #tpu.memory_space<vmem>>, vector<8x128xbf16>
    %cst_14 = arith.constant dense<0.000000e+00> : vector<8x128xf32>
    %25 = tpu.matmul %24, %23, %cst_14 {dimension_numbers = #tpu.dot_dimension_numbers<[1], [0], [0], [1], [0, 0, 1, 1], [], []>} : vector<8x128xbf16>, vector<128x128xbf16>, vector<8x128xf32> -> vector<8x128xf32>
    %c0_15 = arith.constant 0 : index
    %c0_16 = arith.constant 0 : index
    %26 = vector.load %arg4[%c0_15, %c0_16] : memref<8x1xf32, #tpu.memory_space<vmem>>, vector<8x1xf32>
    %27 = vector.broadcast %26 : vector<8x1xf32> to vector<8x128xf32>
    %28 = arith.mulf %25, %27 : vector<8x128xf32>
    %29 = vector.extract_strided_slice %23 {offsets = [0, 0], sizes = [8, 128], strides = [1, 1]} : vector<128x128xbf16> to vector<8x128xbf16>
    %30 = arith.truncf %28 : vector<8x128xf32> to vector<8x128xbf16>
    %c0_17 = arith.constant 0 : index
    %c0_18 = arith.constant 0 : index
    %31 = vector.load %arg6[%c0_17, %c0_18] : memref<256x128xbf16, #tpu.memory_space<vmem>>, vector<256x128xbf16>
    %32 = tpu.concatenate %29, %30 in 1 : vector<8x128xbf16>, vector<8x128xbf16> -> vector<8x256xbf16>
    %cst_19 = arith.constant dense<0.000000e+00> : vector<8x128xf32>
    %33 = tpu.matmul %32, %31, %cst_19 {dimension_numbers = #tpu.dot_dimension_numbers<[1], [0], [0], [1], [0, 0, 1, 1], [], []>} : vector<8x256xbf16>, vector<256x128xbf16>, vector<8x128xf32> -> vector<8x128xf32>
    %34 = vector.extract_strided_slice %0 {offsets = [2, 0], sizes = [1, 128], strides = [1, 1]} : vector<3x128xf32> to vector<1x128xf32>
    %35 = vector.broadcast %34 : vector<1x128xf32> to vector<8x128xf32>
    %36 = arith.addf %33, %35 : vector<8x128xf32>
    %c0_20 = arith.constant 0 : index
    %c0_21 = arith.constant 0 : index
    %37 = vector.load %arg8[%c0_20, %c0_21] : memref<8x128xf32, #tpu.memory_space<vmem>>, vector<8x128xf32>
    tpu.vector_store %arg8[%c0_20, %c0_21], %36 {strides = array<i32>} : memref<8x128xf32, #tpu.memory_space<vmem>>, vector<8x128xf32>,
    return
  }
}

</mosaic_0001>

<llo_original>
// kernel: mpddp_forward.1
$region0: #{mpddp_forward.1}
  #allocation0 [shape = 'u32[]', space=smem, size = 0x4, offset = 0x4, fixed_abs, tag = 'smem constant byte address 0x4 - core index']
  #allocation1 [shape = 'u32[144,128]{1,0:T(1,128)}', space=vmem, size = 0x12000, scoped, tag = 'internal scratch']
  %s0 = inlined_call_operand.vmem [shape: bf16[128,128], index: 0, kind: input, shape index: {}]
  %s1 = inlined_call_operand.vmem [shape: bf16[128,128], index: 1, kind: input, shape index: {}]
  %s2 = inlined_call_operand.vmem [shape: bf16[8,128], index: 2, kind: input, shape index: {}]
  %s3 = inlined_call_operand.vmem [shape: f32[128,1], index: 3, kind: input, shape index: {}]
  %s4 = inlined_call_operand.vmem [shape: f32[8,1], index: 4, kind: input, shape index: {}]
  %s5 = inlined_call_operand.vmem [shape: bf16[256,128], index: 5, kind: input, shape index: {}]
  %s6 = inlined_call_operand.vmem [shape: bf16[256,128], index: 6, kind: input, shape index: {}]
  %s7 = inlined_call_operand.vmem [shape: f32[3,128], index: 7, kind: input, shape index: {}]
  %s8 = inlined_call_operand.hbm [shape: f32[8,128], index: 8, kind: output, shape index: {}]
  %s9 = sld [smem:[#allocation0]]
  $region42: #{mpddp_forward.1} parent=0
    _
  %s11 = ssub.s32 1, %s9
  %s12 = scalar_select 0, %s11, %s9
  $region1: #{mpddp_forward.1} parent=0
    #allocation2 [shape = 'u8[4096]{0}', space=vmem, size = 0x1000, scoped, tag = 'output window, operand 0, single buffered']
    #allocation3 [shape = 's32[1]{0}', space=sflag, size = 0x4, scoped, tag = 'scoped memory for mpddp_forward.1']
    %13 = vsyncpa [#allocation3], 0
    // Predicated region
    $region2: #{mpddp_forward.1} parent=1 // pred_check
      _
    $region3: #{mpddp_forward.1} parent=1 // pred_check_branch
      %15 = sbr.rel (0) target = $region5
    $region4: #{mpddp_forward.1} parent=1 // pred_region
      _
    $region5: #{mpddp_forward.1} parent=1 // pred_fallthru
      _
    // Predicated region
    $region6: #{mpddp_forward.1} parent=1 // pred_check
      _
    $region7: #{mpddp_forward.1} parent=1 // pred_check_branch
      %17 = sbr.rel (0) target = $region9
    $region8: #{mpddp_forward.1} parent=1 // pred_region
      _
    $region9: #{mpddp_forward.1} parent=1 // pred_fallthru
      _
    // Predicated region
    $region10: #{mpddp_forward.1} parent=1 // pred_check
      _
    $region11: #{mpddp_forward.1} parent=1 // pred_check_branch
      %19 = sbr.rel (0) target = $region13
    $region12: #{mpddp_forward.1} parent=1 // pred_region
      _
    $region13: #{mpddp_forward.1} parent=1 // pred_fallthru
      _
    // Predicated region
    $region14: #{mpddp_forward.1} parent=1 // pred_check
      _
    $region15: #{mpddp_forward.1} parent=1 // pred_check_branch
      %21 = sbr.rel (0) target = $region17
    $region16: #{mpddp_forward.1} parent=1 // pred_region
      _
    $region17: #{mpddp_forward.1} parent=1 // pred_fallthru
      _
    // Predicated region
    $region18: #{mpddp_forward.1} parent=1 // pred_check
      _
    $region19: #{mpddp_forward.1} parent=1 // pred_check_branch
      %23 = sbr.rel (0) target = $region21
    $region20: #{mpddp_forward.1} parent=1 // pred_region
      _
    $region21: #{mpddp_forward.1} parent=1 // pred_fallthru
      _
    // Predicated region
    $region22: #{mpddp_forward.1} parent=1 // pred_check
      _
    $region23: #{mpddp_forward.1} parent=1 // pred_check_branch
      %25 = sbr.rel (0) target = $region25
    $region24: #{mpddp_forward.1} parent=1 // pred_region
      _
    $region25: #{mpddp_forward.1} parent=1 // pred_fallthru
      _
    // Predicated region
    $region26: #{mpddp_forward.1} parent=1 // pred_check
      _
    $region27: #{mpddp_forward.1} parent=1 // pred_check_branch
      %27 = sbr.rel (0) target = $region29
    $region28: #{mpddp_forward.1} parent=1 // pred_region
      _
    $region29: #{mpddp_forward.1} parent=1 // pred_fallthru
      _
    // Predicated region
    $region30: #{mpddp_forward.1} parent=1 // pred_check
      _
    $region31: #{mpddp_forward.1} parent=1 // pred_check_branch
      %29 = sbr.rel (0) target = $region33
    $region32: #{mpddp_forward.1} parent=1 // pred_region
      _
    $region33: #{mpddp_forward.1} parent=1 // pred_fallthru
      _
    %v31 = vld [vmem:[%s7] sm:$0x7]
    %v32 = vld [vmem:[%s0] sm:$0xf]
    %v33 = vld [vmem:[%s0 + $0x4] sm:$0xf]
    %v34 = vld [vmem:[%s0 + $0x8] sm:$0xf]
    %v35 = vld [vmem:[%s0 + $0xc] sm:$0xf]
    %v36 = vld [vmem:[%s0 + $0x10] sm:$0xf]
    %v37 = vld [vmem:[%s0 + $0x14] sm:$0xf]
    %v38 = vld [vmem:[%s0 + $0x18] sm:$0xf]
    %v39 = vld [vmem:[%s0 + $0x1c] sm:$0xf]
    %v40 = vld [vmem:[%s0 + $0x20] sm:$0xf]
    %v41 = vld [vmem:[%s0 + $0x24] sm:$0xf]
    %v42 = vld [vmem:[%s0 + $0x28] sm:$0xf]
    %v43 = vld [vmem:[%s0 + $0x2c] sm:$0xf]
    %v44 = vld [vmem:[%s0 + $0x30] sm:$0xf]
    %v45 = vld [vmem:[%s0 + $0x34] sm:$0xf]
    %v46 = vld [vmem:[%s0 + $0x38] sm:$0xf]
    %v47 = vld [vmem:[%s0 + $0x3c] sm:$0xf]
    %v48 = vunpack.c.l.bf16 %v32
    %v49 = vunpack.c.l.bf16 %v33
    %v50 = vunpack.c.l.bf16 %v34
    %v51 = vunpack.c.l.bf16 %v35
    %v52 = vunpack.c.l.bf16 %v36
    %v53 = vunpack.c.l.bf16 %v37
    %v54 = vunpack.c.l.bf16 %v38
    %v55 = vunpack.c.l.bf16 %v39
    %v56 = vunpack.c.l.bf16 %v40
    %v57 = vunpack.c.l.bf16 %v41
    %v58 = vunpack.c.l.bf16 %v42
    %v59 = vunpack.c.l.bf16 %v43
    %v60 = vunpack.c.l.bf16 %v44
    %v61 = vunpack.c.l.bf16 %v45
    %v62 = vunpack.c.l.bf16 %v46
    %v63 = vunpack.c.l.bf16 %v47
    %v64 = vlaneseq
    %v65 = vshrl.u32 %v64, 7
    %v66 = vsub.s32 0, %v65
    %v67 = vrot.slane %v31, %v66
    %v68 = vadd.f32 %v48, %v67
    %v69 = vadd.f32 %v49, %v67
    %v70 = vadd.f32 %v50, %v67
    %v71 = vadd.f32 %v51, %v67
    %v72 = vadd.f32 %v52, %v67
    %v73 = vadd.f32 %v53, %v67
    %v74 = vadd.f32 %v54, %v67
    %v75 = vadd.f32 %v55, %v67
    %v76 = vadd.f32 %v56, %v67
    %v77 = vadd.f32 %v57, %v67
    %v78 = vadd.f32 %v58, %v67
    %v79 = vadd.f32 %v59, %v67
    %v80 = vadd.f32 %v60, %v67
    %v81 = vadd.f32 %v61, %v67
    %v82 = vadd.f32 %v62, %v67
    %v83 = vadd.f32 %v63, %v67
    %v84 = vmax.f32 %v68, 0.0
    %v85 = vmax.f32 %v69, 0.0
    %v86 = vmax.f32 %v70, 0.0
    %v87 = vmax.f32 %v71, 0.0
    %v88 = vmax.f32 %v72, 0.0
    %v89 = vmax.f32 %v73, 0.0
    %v90 = vmax.f32 %v74, 0.0
    %v91 = vmax.f32 %v75, 0.0
    %v92 = vmax.f32 %v76, 0.0
    %v93 = vmax.f32 %v77, 0.0
    %v94 = vmax.f32 %v78, 0.0
    %v95 = vmax.f32 %v79, 0.0
    %v96 = vmax.f32 %v80, 0.0
    %v97 = vmax.f32 %v81, 0.0
    %v98 = vmax.f32 %v82, 0.0
    %v99 = vmax.f32 %v83, 0.0
    %v100 = vpack.c.bf16 %v85, %v84
    %v101 = vpack.c.bf16 %v87, %v86
    %v102 = vpack.c.bf16 %v89, %v88
    %v103 = vpack.c.bf16 %v91, %v90
    %v104 = vpack.c.bf16 %v93, %v92
    %v105 = vpack.c.bf16 %v95, %v94
    %v106 = vpack.c.bf16 %v97, %v96
    %v107 = vpack.c.bf16 %v99, %v98
    %v108 = vld [vmem:[%s1] sm:$0xf]
    %v109 = vld [vmem:[%s1 + $0x4] sm:$0xf]
    %v110 = vld [vmem:[%s1 + $0x8] sm:$0xf]
    %v111 = vld [vmem:[%s1 + $0xc] sm:$0xf]
    %v112 = vld [vmem:[%s1 + $0x10] sm:$0xf]
    %v113 = vld [vmem:[%s1 + $0x14] sm:$0xf]
    %v114 = vld [vmem:[%s1 + $0x18] sm:$0xf]
    %v115 = vld [vmem:[%s1 + $0x1c] sm:$0xf]
    %v116 = vld [vmem:[%s1 + $0x20] sm:$0xf]
    %v117 = vld [vmem:[%s1 + $0x24] sm:$0xf]
    %v118 = vld [vmem:[%s1 + $0x28] sm:$0xf]
    %v119 = vld [vmem:[%s1 + $0x2c] sm:$0xf]
    %v120 = vld [vmem:[%s1 + $0x30] sm:$0xf]
    %v121 = vld [vmem:[%s1 + $0x34] sm:$0xf]
    %v122 = vld [vmem:[%s1 + $0x38] sm:$0xf]
    %v123 = vld [vmem:[%s1 + $0x3c] sm:$0xf]
    %v140 = vunpack.c.l.b16 %v108
    %v141 = vunpack.c.l.b16 %v109
    %v142 = vunpack.c.l.b16 %v110
    %v143 = vunpack.c.l.b16 %v111
    %v144 = vunpack.c.l.b16 %v112
    %v145 = vunpack.c.l.b16 %v113
    %v146 = vunpack.c.l.b16 %v114
    %v147 = vunpack.c.l.b16 %v115
    %v148 = vunpack.c.l.b16 %v116
    %v149 = vunpack.c.l.b16 %v117
    %v150 = vunpack.c.l.b16 %v118
    %v151 = vunpack.c.l.b16 %v119
    %v152 = vunpack.c.l.b16 %v120
    %v153 = vunpack.c.l.b16 %v121
    %v154 = vunpack.c.l.b16 %v122
    %v155 = vunpack.c.l.b16 %v123
    %v156 = vpack.c.b16 %v141, %v140
    %v157 = vpack.c.b16 %v143, %v142
    %v158 = vpack.c.b16 %v145, %v144
    %v159 = vpack.c.b16 %v147, %v146
    %v160 = vpack.c.b16 %v149, %v148
    %v161 = vpack.c.b16 %v151, %v150
    %v162 = vpack.c.b16 %v153, %v152
    %v163 = vpack.c.b16 %v155, %v154
    %172 = vmatprep.subr.bf16.mxu0 0
    %173 = vmatpush1.bf16.msra.mxu0 %v100
    %174 = vmatprep.subr.bf16.mxu0 0
    %175 = vmatpush1.bf16.msra.mxu0 %v101
    %176 = vmatprep.subr.bf16.mxu0 0
    %177 = vmatpush1.bf16.msra.mxu0 %v102
    %178 = vmatprep.subr.bf16.mxu0 0
    %179 = vmatpush1.bf16.msra.mxu0 %v103
    %180 = vmatprep.subr.bf16.mxu0 0
    %181 = vmatpush1.bf16.msra.mxu0 %v104
    %182 = vmatprep.subr.bf16.mxu0 0
    %183 = vmatpush1.bf16.msra.mxu0 %v105
    %184 = vmatprep.subr.bf16.mxu0 0
    %185 = vmatpush1.bf16.msra.mxu0 %v106
    %186 = vmatprep.subr.bf16.mxu0 0
    %187 = vmatpush1.bf16.msra.mxu0 %v107
    %188 = vmatprep.subr.bf16.mxu0 0
    %189 = vmatpush1.bf16.msra.mxu0 0
    %190 = vmatprep.subr.bf16.mxu0 0
    %191 = vmatpush1.bf16.msra.mxu0 0
    %192 = vmatprep.subr.bf16.mxu0 0
    %193 = vmatpush1.bf16.msra.mxu0 0
    %194 = vmatprep.subr.bf16.mxu0 0
    %195 = vmatpush1.bf16.msra.mxu0 0
    %196 = vmatprep.subr.bf16.mxu0 0
    %197 = vmatpush1.bf16.msra.mxu0 0
    %198 = vmatprep.subr.bf16.mxu0 0
    %199 = vmatpush1.bf16.msra.mxu0 0
    %200 = vmatprep.subr.bf16.mxu0 0
    %201 = vmatpush1.bf16.msra.mxu0 0
    %202 = vmatprep.subr.bf16.mxu0 0
    %203 = vmatpush1.bf16.msra.mxu0 0
    %204 = vmatprep.mubr.bf16.mxu0 0
    %205 = vmatmul.mubr.bf16.gmra.mrb[0].mxu0 %v156
    %v206 = vpop.f32.mrb[0].mxu0
    %v207 = vadd.f32 0.0, %v206
    %v208 = vpop.f32.mrb[0].mxu0
    %v209 = vpop.f32.mrb[0].mxu0
    %v210 = vadd.f32 0.0, %v209
    %v211 = vpop.f32.mrb[0].mxu0
    %212 = vmatprep.mubr.bf16.mxu0 0
    %213 = vmatmul.mubr.bf16.gmra.mrb[0].mxu0 %v157
    %v214 = vpop.f32.mrb[0].mxu0
    %v215 = vadd.f32 0.0, %v214
    %v216 = vpop.f32.mrb[0].mxu0
    %v217 = vpop.f32.mrb[0].mxu0
    %v218 = vadd.f32 0.0, %v217
    %v219 = vpop.f32.mrb[0].mxu0
    %220 = vmatprep.mubr.bf16.mxu0 0
    %221 = vmatmul.mubr.bf16.gmra.mrb[0].mxu0 %v158
    %v222 = vpop.f32.mrb[0].mxu0
    %v223 = vadd.f32 0.0, %v222
    %v224 = vpop.f32.mrb[0].mxu0
    %v225 = vpop.f32.mrb[0].mxu0
    %v226 = vadd.f32 0.0, %v225
    %v227 = vpop.f32.mrb[0].mxu0
    %228 = vmatprep.mubr.bf16.mxu0 0
    %229 = vmatmul.mubr.bf16.gmra.mrb[0].mxu0 %v159
    %v230 = vpop.f32.mrb[0].mxu0
    %v231 = vadd.f32 0.0, %v230
    %v232 = vpop.f32.mrb[0].mxu0
    %v233 = vpop.f32.mrb[0].mxu0
    %v234 = vadd.f32 0.0, %v233
    %v235 = vpop.f32.mrb[0].mxu0
    %236 = vmatprep.mubr.bf16.mxu0 0
    %237 = vmatmul.mubr.bf16.gmra.mrb[0].mxu0 %v160
    %v238 = vpop.f32.mrb[0].mxu0
    %v239 = vadd.f32 0.0, %v238
    %v240 = vpop.f32.mrb[0].mxu0
    %v241 = vpop.f32.mrb[0].mxu0
    %v242 = vadd.f32 0.0, %v241
    %v243 = vpop.f32.mrb[0].mxu0
    %244 = vmatprep.mubr.bf16.mxu0 0
    %245 = vmatmul.mubr.bf16.gmra.mrb[0].mxu0 %v161
    %v246 = vpop.f32.mrb[0].mxu0
    %v247 = vadd.f32 0.0, %v246
    %v248 = vpop.f32.mrb[0].mxu0
    %v249 = vpop.f32.mrb[0].mxu0
    %v250 = vadd.f32 0.0, %v249
    %v251 = vpop.f32.mrb[0].mxu0
    %252 = vmatprep.mubr.bf16.mxu0 0
    %253 = vmatmul.mubr.bf16.gmra.mrb[0].mxu0 %v162
    %v254 = vpop.f32.mrb[0].mxu0
    %v255 = vadd.f32 0.0, %v254
    %v256 = vpop.f32.mrb[0].mxu0
    %v257 = vpop.f32.mrb[0].mxu0
    %v258 = vadd.f32 0.0, %v257
    %v259 = vpop.f32.mrb[0].mxu0
    %260 = vmatprep.mubr.bf16.mxu0 0
    %261 = vmatmul.mubr.bf16.gmra.mrb[0].mxu0 %v163
    %v262 = vpop.f32.mrb[0].mxu0
    %v263 = vadd.f32 0.0, %v262
    %v264 = vpop.f32.mrb[0].mxu0
    %v265 = vpop.f32.mrb[0].mxu0
    %v266 = vadd.f32 0.0, %v265
    %v267 = vpop.f32.mrb[0].mxu0
    %268 = vdwg.mxu0
    %v269 = vld [vmem:[%s3] sm:$0xff]
    %v270 = vld [vmem:[%s3 + $0x8] sm:$0xff]
    %v271 = vld [vmem:[%s3 + $0x10] sm:$0xff]
    %v272 = vld [vmem:[%s3 + $0x18] sm:$0xff]
    %v273 = vld [vmem:[%s3 + $0x20] sm:$0xff]
    %v274 = vld [vmem:[%s3 + $0x28] sm:$0xff]
    %v275 = vld [vmem:[%s3 + $0x30] sm:$0xff]
    %v276 = vld [vmem:[%s3 + $0x38] sm:$0xff]
    %v277 = vld [vmem:[%s3 + $0x40] sm:$0xff]
    %v278 = vld [vmem:[%s3 + $0x48] sm:$0xff]
    %v279 = vld [vmem:[%s3 + $0x50] sm:$0xff]
    %v280 = vld [vmem:[%s3 + $0x58] sm:$0xff]
    %v281 = vld [vmem:[%s3 + $0x60] sm:$0xff]
    %v282 = vld [vmem:[%s3 + $0x68] sm:$0xff]
    %v283 = vld [vmem:[%s3 + $0x70] sm:$0xff]
    %v284 = vld [vmem:[%s3 + $0x78] sm:$0xff]
    %286 = vset.pattern.permute.xlu0 0
    %287 = vperm.xlu0 %286, %v269
    %v288 = vpop.permute.xlu0 %287
    %291 = vset.pattern.permute.xlu0 0
    %292 = vperm.xlu0 %291, %v270
    %v293 = vpop.permute.xlu0 %292
    %296 = vset.pattern.permute.xlu0 0
    %297 = vperm.xlu0 %296, %v271
    %v298 = vpop.permute.xlu0 %297
    %301 = vset.pattern.permute.xlu0 0
    %302 = vperm.xlu0 %301, %v272
    %v303 = vpop.permute.xlu0 %302
    %306 = vset.pattern.permute.xlu0 0
    %307 = vperm.xlu0 %306, %v273
    %v308 = vpop.permute.xlu0 %307
    %311 = vset.pattern.permute.xlu0 0
    %312 = vperm.xlu0 %311, %v274
    %v313 = vpop.permute.xlu0 %312
    %316 = vset.pattern.permute.xlu0 0
    %317 = vperm.xlu0 %316, %v275
    %v318 = vpop.permute.xlu0 %317
    %321 = vset.pattern.permute.xlu0 0
    %322 = vperm.xlu0 %321, %v276
    %v323 = vpop.permute.xlu0 %322
    %326 = vset.pattern.permute.xlu0 0
    %327 = vperm.xlu0 %326, %v277
    %v328 = vpop.permute.xlu0 %327
    %331 = vset.pattern.permute.xlu0 0
    %332 = vperm.xlu0 %331, %v278
    %v333 = vpop.permute.xlu0 %332
    %336 = vset.pattern.permute.xlu0 0
    %337 = vperm.xlu0 %336, %v279
    %v338 = vpop.permute.xlu0 %337
    %341 = vset.pattern.permute.xlu0 0
    %342 = vperm.xlu0 %341, %v280
    %v343 = vpop.permute.xlu0 %342
    %346 = vset.pattern.permute.xlu0 0
    %347 = vperm.xlu0 %346, %v281
    %v348 = vpop.permute.xlu0 %347
    %351 = vset.pattern.permute.xlu0 0
    %352 = vperm.xlu0 %351, %v282
    %v353 = vpop.permute.xlu0 %352
    %356 = vset.pattern.permute.xlu0 0
    %357 = vperm.xlu0 %356, %v283
    %v358 = vpop.permute.xlu0 %357
    %361 = vset.pattern.permute.xlu0 0
    %362 = vperm.xlu0 %361, %v284
    %v363 = vpop.permute.xlu0 %362
    %v365 = vmul.f32 %v207, %v288
    %v366 = vmul.f32 %v210, %v293
    %v367 = vmul.f32 %v215, %v298
    %v368 = vmul.f32 %v218, %v303
    %v369 = vmul.f32 %v223, %v308
    %v370 = vmul.f32 %v226, %v313
    %v371 = vmul.f32 %v231, %v318
    %v372 = vmul.f32 %v234, %v323
    %v373 = vmul.f32 %v239, %v328
    %v374 = vmul.f32 %v242, %v333
    %v375 = vmul.f32 %v247, %v338
    %v376 = vmul.f32 %v250, %v343
    %v377 = vmul.f32 %v255, %v348
    %v378 = vmul.f32 %v258, %v353
    %v379 = vmul.f32 %v263, %v358
    %v380 = vmul.f32 %v266, %v363
    %v381 = vpack.c.bf16 %v366, %v365
    %v382 = vpack.c.bf16 %v368, %v367
    %v383 = vpack.c.bf16 %v370, %v369
    %v384 = vpack.c.bf16 %v372, %v371
    %v385 = vpack.c.bf16 %v374, %v373
    %v386 = vpack.c.bf16 %v376, %v375
    %v387 = vpack.c.bf16 %v378, %v377
    %v388 = vpack.c.bf16 %v380, %v379
    %v389 = vld [vmem:[%s5] sm:$0xf]
    %v390 = vld [vmem:[%s5 + $0x4] sm:$0xf]
    %v391 = vld [vmem:[%s5 + $0x8] sm:$0xf]
    %v392 = vld [vmem:[%s5 + $0xc] sm:$0xf]
    %v393 = vld [vmem:[%s5 + $0x10] sm:$0xf]
    %v394 = vld [vmem:[%s5 + $0x14] sm:$0xf]
    %v395 = vld [vmem:[%s5 + $0x18] sm:$0xf]
    %v396 = vld [vmem:[%s5 + $0x1c] sm:$0xf]
    %v397 = vld [vmem:[%s5 + $0x20] sm:$0xf]
    %v398 = vld [vmem:[%s5 + $0x24] sm:$0xf]
    %v399 = vld [vmem:[%s5 + $0x28] sm:$0xf]
    %v400 = vld [vmem:[%s5 + $0x2c] sm:$0xf]
    %v401 = vld [vmem:[%s5 + $0x30] sm:$0xf]
    %v402 = vld [vmem:[%s5 + $0x34] sm:$0xf]
    %v403 = vld [vmem:[%s5 + $0x38] sm:$0xf]
    %v404 = vld [vmem:[%s5 + $0x3c] sm:$0xf]
    %v405 = vld [vmem:[%s5 + $0x40] sm:$0xf]
    %v406 = vld [vmem:[%s5 + $0x44] sm:$0xf]
    %v407 = vld [vmem:[%s5 + $0x48] sm:$0xf]
    %v408 = vld [vmem:[%s5 + $0x4c] sm:$0xf]
    %v409 = vld [vmem:[%s5 + $0x50] sm:$0xf]
    %v410 = vld [vmem:[%s5 + $0x54] sm:$0xf]
    %v411 = vld [vmem:[%s5 + $0x58] sm:$0xf]
    %v412 = vld [vmem:[%s5 + $0x5c] sm:$0xf]
    %v413 = vld [vmem:[%s5 + $0x60] sm:$0xf]
    %v414 = vld [vmem:[%s5 + $0x64] sm:$0xf]
    %v415 = vld [vmem:[%s5 + $0x68] sm:$0xf]
    %v416 = vld [vmem:[%s5 + $0x6c] sm:$0xf]
    %v417 = vld [vmem:[%s5 + $0x70] sm:$0xf]
    %v418 = vld [vmem:[%s5 + $0x74] sm:$0xf]
    %v419 = vld [vmem:[%s5 + $0x78] sm:$0xf]
    %v420 = vld [vmem:[%s5 + $0x7c] sm:$0xf]
    %v421 = vlaneseq
    %v422 = vshrl.u32 %v421, 7
    %v423 = vsub.s32 1, %v422
    %v424 = vrot.slane %v31, %v423
    %v457 = vunpack.c.l.b16 %v389
    %v458 = vunpack.c.l.b16 %v390
    %v459 = vunpack.c.l.b16 %v391
    %v460 = vunpack.c.l.b16 %v392
    %v461 = vunpack.c.l.b16 %v393
    %v462 = vunpack.c.l.b16 %v394
    %v463 = vunpack.c.l.b16 %v395
    %v464 = vunpack.c.l.b16 %v396
    %v465 = vunpack.c.l.b16 %v397
    %v466 = vunpack.c.l.b16 %v398
    %v467 = vunpack.c.l.b16 %v399
    %v468 = vunpack.c.l.b16 %v400
    %v469 = vunpack.c.l.b16 %v401
    %v470 = vunpack.c.l.b16 %v402
    %v471 = vunpack.c.l.b16 %v403
    %v472 = vunpack.c.l.b16 %v404
    %v473 = vunpack.c.l.b16 %v405
    %v474 = vunpack.c.l.b16 %v406
    %v475 = vunpack.c.l.b16 %v407
    %v476 = vunpack.c.l.b16 %v408
    %v477 = vunpack.c.l.b16 %v409
    %v478 = vunpack.c.l.b16 %v410
    %v479 = vunpack.c.l.b16 %v411
    %v480 = vunpack.c.l.b16 %v412
    %v481 = vunpack.c.l.b16 %v413
    %v482 = vunpack.c.l.b16 %v414
    %v483 = vunpack.c.l.b16 %v415
    %v484 = vunpack.c.l.b16 %v416
    %v485 = vunpack.c.l.b16 %v417
    %v486 = vunpack.c.l.b16 %v418
    %v487 = vunpack.c.l.b16 %v419
    %v488 = vunpack.c.l.b16 %v420
    %v489 = vpack.c.b16 %v458, %v457
    %v490 = vpack.c.b16 %v460, %v459
    %v491 = vpack.c.b16 %v462, %v461
    %v492 = vpack.c.b16 %v464, %v463
    %v493 = vpack.c.b16 %v466, %v465
    %v494 = vpack.c.b16 %v468, %v467
    %v495 = vpack.c.b16 %v470, %v469
    %v496 = vpack.c.b16 %v472, %v471
    %v497 = vpack.c.b16 %v474, %v473
    %v498 = vpack.c.b16 %v476, %v475
    %v499 = vpack.c.b16 %v478, %v477
    %v500 = vpack.c.b16 %v480, %v479
    %v501 = vpack.c.b16 %v482, %v481
    %v502 = vpack.c.b16 %v484, %v483
    %v503 = vpack.c.b16 %v486, %v485
    %v504 = vpack.c.b16 %v488, %v487
    %521 = vmatprep.subr.bf16.mxu0 0
    %522 = vmatpush1.bf16.msra.mxu0 %v489
    %523 = vmatprep.subr.bf16.mxu0 0
    %524 = vmatpush1.bf16.msra.mxu0 %v490
    %525 = vmatprep.subr.bf16.mxu0 0
    %526 = vmatpush1.bf16.msra.mxu0 %v491
    %527 = vmatprep.subr.bf16.mxu0 0
    %528 = vmatpush1.bf16.msra.mxu0 %v492
    %529 = vmatprep.subr.bf16.mxu0 0
    %530 = vmatpush1.bf16.msra.mxu0 %v493
    %531 = vmatprep.subr.bf16.mxu0 0
    %532 = vmatpush1.bf16.msra.mxu0 %v494
    %533 = vmatprep.subr.bf16.mxu0 0
    %534 = vmatpush1.bf16.msra.mxu0 %v495
    %535 = vmatprep.subr.bf16.mxu0 0
    %536 = vmatpush1.bf16.msra.mxu0 %v496
    %537 = vmatprep.subr.bf16.mxu0 0
    %538 = vmatpush1.bf16.msra.mxu0 %v497
    %539 = vmatprep.subr.bf16.mxu0 0
    %540 = vmatpush1.bf16.msra.mxu0 %v498
    %541 = vmatprep.subr.bf16.mxu0 0
    %542 = vmatpush1.bf16.msra.mxu0 %v499
    %543 = vmatprep.subr.bf16.mxu0 0
    %544 = vmatpush1.bf16.msra.mxu0 %v500
    %545 = vmatprep.subr.bf16.mxu0 0
    %546 = vmatpush1.bf16.msra.mxu0 %v501
    %547 = vmatprep.subr.bf16.mxu0 0
    %548 = vmatpush1.bf16.msra.mxu0 %v502
    %549 = vmatprep.subr.bf16.mxu0 0
    %550 = vmatpush1.bf16.msra.mxu0 %v503
    %551 = vmatprep.subr.bf16.mxu0 0
    %552 = vmatpush1.bf16.msra.mxu0 %v504
    %553 = vmatprep.mubr.bf16.mxu0 %v381
    %554 = vmatmul.mubr.bf16.gmra.mrb[0].mxu0 %v100
    %v555 = vpop.f32.mrb[0].mxu0
    %v556 = vadd.f32 %v424, %v555
    %v557 = vpop.f32.mrb[0].mxu0
    %v558 = vpop.f32.mrb[0].mxu0
    %v559 = vadd.f32 %v424, %v558
    %v560 = vpop.f32.mrb[0].mxu0
    %561 = vmatprep.mubr.bf16.mxu0 %v382
    %562 = vmatmul.mubr.bf16.gmra.mrb[0].mxu0 %v101
    %v563 = vpop.f32.mrb[0].mxu0
    %v564 = vadd.f32 %v424, %v563
    %v565 = vpop.f32.mrb[0].mxu0
    %v566 = vpop.f32.mrb[0].mxu0
    %v567 = vadd.f32 %v424, %v566
    %v568 = vpop.f32.mrb[0].mxu0
    %569 = vmatprep.mubr.bf16.mxu0 %v383
    %570 = vmatmul.mubr.bf16.gmra.mrb[0].mxu0 %v102
    %v571 = vpop.f32.mrb[0].mxu0
    %v572 = vadd.f32 %v424, %v571
    %v573 = vpop.f32.mrb[0].mxu0
    %v574 = vpop.f32.mrb[0].mxu0
    %v575 = vadd.f32 %v424, %v574
    %v576 = vpop.f32.mrb[0].mxu0
    %577 = vmatprep.mubr.bf16.mxu0 %v384
    %578 = vmatmul.mubr.bf16.gmra.mrb[0].mxu0 %v103
    %v579 = vpop.f32.mrb[0].mxu0
    %v580 = vadd.f32 %v424, %v579
    %v581 = vpop.f32.mrb[0].mxu0
    %v582 = vpop.f32.mrb[0].mxu0
    %v583 = vadd.f32 %v424, %v582
    %v584 = vpop.f32.mrb[0].mxu0
    %585 = vmatprep.mubr.bf16.mxu0 %v385
    %586 = vmatmul.mubr.bf16.gmra.mrb[0].mxu0 %v104
    %v587 = vpop.f32.mrb[0].mxu0
    %v588 = vadd.f32 %v424, %v587
    %v589 = vpop.f32.mrb[0].mxu0
    %v590 = vpop.f32.mrb[0].mxu0
    %v591 = vadd.f32 %v424, %v590
    %v592 = vpop.f32.mrb[0].mxu0
    %593 = vmatprep.mubr.bf16.mxu0 %v386
    %594 = vmatmul.mubr.bf16.gmra.mrb[0].mxu0 %v105
    %v595 = vpop.f32.mrb[0].mxu0
    %v596 = vadd.f32 %v424, %v595
    %v597 = vpop.f32.mrb[0].mxu0
    %v598 = vpop.f32.mrb[0].mxu0
    %v599 = vadd.f32 %v424, %v598
    %v600 = vpop.f32.mrb[0].mxu0
    %601 = vmatprep.mubr.bf16.mxu0 %v387
    %602 = vmatmul.mubr.bf16.gmra.mrb[0].mxu0 %v106
    %v603 = vpop.f32.mrb[0].mxu0
    %v604 = vadd.f32 %v424, %v603
    %v605 = vpop.f32.mrb[0].mxu0
    %v606 = vpop.f32.mrb[0].mxu0
    %v607 = vadd.f32 %v424, %v606
    %v608 = vpop.f32.mrb[0].mxu0
    %609 = vmatprep.mubr.bf16.mxu0 %v388
    %610 = vmatmul.mubr.bf16.gmra.mrb[0].mxu0 %v107
    %v611 = vpop.f32.mrb[0].mxu0
    %v612 = vadd.f32 %v424, %v611
    %v613 = vpop.f32.mrb[0].mxu0
    %v614 = vpop.f32.mrb[0].mxu0
    %v615 = vadd.f32 %v424, %v614
    %v616 = vpop.f32.mrb[0].mxu0
    %617 = vdwg.mxu0
    %v618 = vmax.f32 %v556, 0.0
    %v619 = vmax.f32 %v559, 0.0
    %v620 = vmax.f32 %v564, 0.0
    %v621 = vmax.f32 %v567, 0.0
    %v622 = vmax.f32 %v572, 0.0
    %v623 = vmax.f32 %v575, 0.0
    %v624 = vmax.f32 %v580, 0.0
    %v625 = vmax.f32 %v583, 0.0
    %v626 = vmax.f32 %v588, 0.0
    %v627 = vmax.f32 %v591, 0.0
    %v628 = vmax.f32 %v596, 0.0
    %v629 = vmax.f32 %v599, 0.0
    %v630 = vmax.f32 %v604, 0.0
    %v631 = vmax.f32 %v607, 0.0
    %v632 = vmax.f32 %v612, 0.0
    %v633 = vmax.f32 %v615, 0.0
    %v634 = vpack.c.bf16 %v619, %v618
    %v635 = vpack.c.bf16 %v621, %v620
    %v636 = vpack.c.bf16 %v623, %v622
    %v637 = vpack.c.bf16 %v625, %v624
    %v638 = vpack.c.bf16 %v627, %v626
    %v639 = vpack.c.bf16 %v629, %v628
    %v640 = vpack.c.bf16 %v631, %v630
    %v641 = vpack.c.bf16 %v633, %v632
    %v642 = vld [vmem:[%s2] sm:$0xf]
    %643 = vmatprep.subr.bf16.mxu0 0
    %644 = vmatpush1.bf16.msra.mxu0 %v634
    %645 = vmatprep.subr.bf16.mxu0 0
    %646 = vmatpush1.bf16.msra.mxu0 %v635
    %647 = vmatprep.subr.bf16.mxu0 0
    %648 = vmatpush1.bf16.msra.mxu0 %v636
    %649 = vmatprep.subr.bf16.mxu0 0
    %650 = vmatpush1.bf16.msra.mxu0 %v637
    %651 = vmatprep.subr.bf16.mxu0 0
    %652 = vmatpush1.bf16.msra.mxu0 %v638
    %653 = vmatprep.subr.bf16.mxu0 0
    %654 = vmatpush1.bf16.msra.mxu0 %v639
    %655 = vmatprep.subr.bf16.mxu0 0
    %656 = vmatpush1.bf16.msra.mxu0 %v640
    %657 = vmatprep.subr.bf16.mxu0 0
    %658 = vmatpush1.bf16.msra.mxu0 %v641
    %659 = vmatprep.subr.bf16.mxu0 0
    %660 = vmatpush1.bf16.msra.mxu0 0
    %661 = vmatprep.subr.bf16.mxu0 0
    %662 = vmatpush1.bf16.msra.mxu0 0
    %663 = vmatprep.subr.bf16.mxu0 0
    %664 = vmatpush1.bf16.msra.mxu0 0
    %665 = vmatprep.subr.bf16.mxu0 0
    %666 = vmatpush1.bf16.msra.mxu0 0
    %667 = vmatprep.subr.bf16.mxu0 0
    %668 = vmatpush1.bf16.msra.mxu0 0
    %669 = vmatprep.subr.bf16.mxu0 0
    %670 = vmatpush1.bf16.msra.mxu0 0
    %671 = vmatprep.subr.bf16.mxu0 0
    %672 = vmatpush1.bf16.msra.mxu0 0
    %673 = vmatprep.subr.bf16.mxu0 0
    %674 = vmatpush1.bf16.msra.mxu0 0
    %675 = vmatprep.mubr.bf16.mxu0 0
    %676 = vmatmul.mubr.bf16.gmra.mrb[0].mxu0 %v642
    %v677 = vpop.f32.mrb[0].mxu0
    %v678 = vadd.f32 0.0, %v677
    %v679 = vpop.f32.mrb[0].mxu0
    %v680 = vpop.f32.mrb[0].mxu0
    %v681 = vpop.f32.mrb[0].mxu0
    %682 = vdwg.mxu0
    %v683 = vld [vmem:[%s4] sm:$0xff]
    %685 = vset.pattern.permute.xlu0 0
    %686 = vperm.xlu0 %685, %v683
    %v687 = vpop.permute.xlu0 %686
    %v689 = vmul.f32 %v678, %v687
    %v690 = vpack.c.bf16 %v689, %v689
    %v691 = vld [vmem:[%s6] sm:$0xf]
    %v692 = vld [vmem:[%s6 + $0x4] sm:$0xf]
    %v693 = vld [vmem:[%s6 + $0x8] sm:$0xf]
    %v694 = vld [vmem:[%s6 + $0xc] sm:$0xf]
    %v695 = vld [vmem:[%s6 + $0x10] sm:$0xf]
    %v696 = vld [vmem:[%s6 + $0x14] sm:$0xf]
    %v697 = vld [vmem:[%s6 + $0x18] sm:$0xf]
    %v698 = vld [vmem:[%s6 + $0x1c] sm:$0xf]
    %v699 = vld [vmem:[%s6 + $0x20] sm:$0xf]
    %v700 = vld [vmem:[%s6 + $0x24] sm:$0xf]
    %v701 = vld [vmem:[%s6 + $0x28] sm:$0xf]
    %v702 = vld [vmem:[%s6 + $0x2c] sm:$0xf]
    %v703 = vld [vmem:[%s6 + $0x30] sm:$0xf]
    %v704 = vld [vmem:[%s6 + $0x34] sm:$0xf]
    %v705 = vld [vmem:[%s6 + $0x38] sm:$0xf]
    %v706 = vld [vmem:[%s6 + $0x3c] sm:$0xf]
    %v707 = vld [vmem:[%s6 + $0x40] sm:$0xf]
    %v708 = vld [vmem:[%s6 + $0x44] sm:$0xf]
    %v709 = vld [vmem:[%s6 + $0x48] sm:$0xf]
    %v710 = vld [vmem:[%s6 + $0x4c] sm:$0xf]
    %v711 = vld [vmem:[%s6 + $0x50] sm:$0xf]
    %v712 = vld [vmem:[%s6 + $0x54] sm:$0xf]
    %v713 = vld [vmem:[%s6 + $0x58] sm:$0xf]
    %v714 = vld [vmem:[%s6 + $0x5c] sm:$0xf]
    %v715 = vld [vmem:[%s6 + $0x60] sm:$0xf]
    %v716 = vld [vmem:[%s6 + $0x64] sm:$0xf]
    %v717 = vld [vmem:[%s6 + $0x68] sm:$0xf]
    %v718 = vld [vmem:[%s6 + $0x6c] sm:$0xf]
    %v719 = vld [vmem:[%s6 + $0x70] sm:$0xf]
    %v720 = vld [vmem:[%s6 + $0x74] sm:$0xf]
    %v721 = vld [vmem:[%s6 + $0x78] sm:$0xf]
    %v722 = vld [vmem:[%s6 + $0x7c] sm:$0xf]
    %v723 = vlaneseq
    %v724 = vshrl.u32 %v723, 7
    %v725 = vsub.s32 2, %v724
    %v726 = vrot.slane %v31, %v725
    %v759 = vunpack.c.l.b16 %v691
    %v760 = vunpack.c.l.b16 %v692
    %v761 = vunpack.c.l.b16 %v693
    %v762 = vunpack.c.l.b16 %v694
    %v763 = vunpack.c.l.b16 %v695
    %v764 = vunpack.c.l.b16 %v696
    %v765 = vunpack.c.l.b16 %v697
    %v766 = vunpack.c.l.b16 %v698
    %v767 = vunpack.c.l.b16 %v699
    %v768 = vunpack.c.l.b16 %v700
    %v769 = vunpack.c.l.b16 %v701
    %v770 = vunpack.c.l.b16 %v702
    %v771 = vunpack.c.l.b16 %v703
    %v772 = vunpack.c.l.b16 %v704
    %v773 = vunpack.c.l.b16 %v705
    %v774 = vunpack.c.l.b16 %v706
    %v775 = vunpack.c.l.b16 %v707
    %v776 = vunpack.c.l.b16 %v708
    %v777 = vunpack.c.l.b16 %v709
    %v778 = vunpack.c.l.b16 %v710
    %v779 = vunpack.c.l.b16 %v711
    %v780 = vunpack.c.l.b16 %v712
    %v781 = vunpack.c.l.b16 %v713
    %v782 = vunpack.c.l.b16 %v714
    %v783 = vunpack.c.l.b16 %v715
    %v784 = vunpack.c.l.b16 %v716
    %v785 = vunpack.c.l.b16 %v717
    %v786 = vunpack.c.l.b16 %v718
    %v787 = vunpack.c.l.b16 %v719
    %v788 = vunpack.c.l.b16 %v720
    %v789 = vunpack.c.l.b16 %v721
    %v790 = vunpack.c.l.b16 %v722
    %v791 = vpack.c.b16 %v760, %v759
    %v792 = vpack.c.b16 %v762, %v761
    %v793 = vpack.c.b16 %v764, %v763
    %v794 = vpack.c.b16 %v766, %v765
    %v795 = vpack.c.b16 %v768, %v767
    %v796 = vpack.c.b16 %v770, %v769
    %v797 = vpack.c.b16 %v772, %v771
    %v798 = vpack.c.b16 %v774, %v773
    %v799 = vpack.c.b16 %v776, %v775
    %v800 = vpack.c.b16 %v778, %v777
    %v801 = vpack.c.b16 %v780, %v779
    %v802 = vpack.c.b16 %v782, %v781
    %v803 = vpack.c.b16 %v784, %v783
    %v804 = vpack.c.b16 %v786, %v785
    %v805 = vpack.c.b16 %v788, %v787
    %v806 = vpack.c.b16 %v790, %v789
    %823 = vmatprep.subr.bf16.mxu0 0
    %824 = vmatpush1.bf16.msra.mxu0 %v791
    %825 = vmatprep.subr.bf16.mxu0 0
    %826 = vmatpush1.bf16.msra.mxu0 %v792
    %827 = vmatprep.subr.bf16.mxu0 0
    %828 = vmatpush1.bf16.msra.mxu0 %v793
    %829 = vmatprep.subr.bf16.mxu0 0
    %830 = vmatpush1.bf16.msra.mxu0 %v794
    %831 = vmatprep.subr.bf16.mxu0 0
    %832 = vmatpush1.bf16.msra.mxu0 %v795
    %833 = vmatprep.subr.bf16.mxu0 0
    %834 = vmatpush1.bf16.msra.mxu0 %v796
    %835 = vmatprep.subr.bf16.mxu0 0
    %836 = vmatpush1.bf16.msra.mxu0 %v797
    %837 = vmatprep.subr.bf16.mxu0 0
    %838 = vmatpush1.bf16.msra.mxu0 %v798
    %839 = vmatprep.subr.bf16.mxu0 0
    %840 = vmatpush1.bf16.msra.mxu0 %v799
    %841 = vmatprep.subr.bf16.mxu0 0
    %842 = vmatpush1.bf16.msra.mxu0 %v800
    %843 = vmatprep.subr.bf16.mxu0 0
    %844 = vmatpush1.bf16.msra.mxu0 %v801
    %845 = vmatprep.subr.bf16.mxu0 0
    %846 = vmatpush1.bf16.msra.mxu0 %v802
    %847 = vmatprep.subr.bf16.mxu0 0
    %848 = vmatpush1.bf16.msra.mxu0 %v803
    %849 = vmatprep.subr.bf16.mxu0 0
    %850 = vmatpush1.bf16.msra.mxu0 %v804
    %851 = vmatprep.subr.bf16.mxu0 0
    %852 = vmatpush1.bf16.msra.mxu0 %v805
    %853 = vmatprep.subr.bf16.mxu0 0
    %854 = vmatpush1.bf16.msra.mxu0 %v806
    %855 = vmatprep.mubr.bf16.mxu0 %v690
    %856 = vmatmul.mubr.bf16.gmra.mrb[0].mxu0 %v634
    %v857 = vpop.f32.mrb[0].mxu0
    %v858 = vadd.f32 %v726, %v857
    %v859 = vpop.f32.mrb[0].mxu0
    %v860 = vpop.f32.mrb[0].mxu0
    %v861 = vpop.f32.mrb[0].mxu0
    %862 = vdwg.mxu0
    %863 = vst [vmem:[#allocation2] sm:$0xff] %v858
    // Predicated region
    $region34: #{mpddp_forward.1} parent=1 // pred_check
      _
    $region35: #{mpddp_forward.1} parent=1 // pred_check_branch
      %865 = sbr.rel (0) target = $region37
    $region36: #{mpddp_forward.1} parent=1 // pred_region
      %s867 = ssub.s32 128, 128
      %868 = vsyncadd [#allocation3], %s867
      %s870 = sshll.u32 [#allocation2], 4
      %s871 = int_to_ptr.vmem [resolvable:$true] %s870
      %873 = dma.vmem_to_hbm [thread:$0]  %s871, 128, %s8, [#allocation3]
    $region37: #{mpddp_forward.1} parent=1 // pred_fallthru
      _
    // Predicated region
    $region38: #{mpddp_forward.1} parent=1 // pred_check
      _
    $region39: #{mpddp_forward.1} parent=1 // pred_check_branch
      %875 = sbr.rel (0) target = $region41
    $region40: #{mpddp_forward.1} parent=1 // pred_region
      %876 = dma.done [#allocation3], 128
    $region41: #{mpddp_forward.1} parent=1 // pred_fallthru
      _
    %877 = vsyncpa [#allocation3], 1

</llo_original>
